<compile_context>
chip_gen: v7x
topology: tpu7x:2x2x1
jax: 0.10.0
libtpu: 0.0.40
codegen_flags: <defaults>
</compile_context>

<pallas_src>
import functools

import jax
import jax.numpy as jnp
from jax.experimental import pallas as pl
from jax.experimental.pallas import tpu as pltpu


def _round_up(x, m):
    return ((x + m - 1) // m) * m


def _choose_tile_n(n, c, itemsize, max_tile=8192, budget_bytes=8 << 20):
    """Largest pixel tile (multiple of 128) whose double-buffered logits slab stays small."""
    c_pad = max(_round_up(c, 8), 8)
    cap = max(128, budget_bytes // (2 * c_pad * itemsize))
    cap = min(int(cap), max_tile)
    cap = (cap // 128) * 128
    return int(min(cap, _round_up(n, 128)))


# ----------------------------- pass 1: class-area ratio table ----------------------------- #

def _class_ratio_kernel(tgt_ref, ratio_ref, counts_ref, valid_ref, *,
                        ignore_index, weight_min, num_class):
    n = pl.program_id(0)

    @pl.when(n == 0)
    def _():
        counts_ref[...] = jnp.zeros_like(counts_ref)
        valid_ref[...] = jnp.zeros_like(valid_ref)

    tgt = tgt_ref[...]                                              # (B, 1, TILE_N) int32
    b, _, tn = tgt.shape
    cls_iota = jax.lax.broadcasted_iota(jnp.int32, (b, num_class, tn), 1)
    onehot = (tgt == cls_iota).astype(jnp.float32)                  # (B, C, TILE_N) — tiny pass
    counts_ref[...] += jnp.sum(onehot, axis=2)                      # (B, C)
    valid_ref[...] += jnp.sum((tgt != ignore_index).astype(jnp.float32), axis=2)   # (B, 1)

    @pl.when(n == pl.num_programs(0) - 1)
    def _():
        # Guard all-ignored images (0/0): their ratios are never looked up anyway.
        ts = jnp.maximum(valid_ref[...], 1.0)                       # (B, 1)
        ratio_ref[...] = jnp.maximum(1.0 - counts_ref[...] / ts, weight_min)       # (B, C)


# ----------------------------- pass 2: tiled weighted cross-entropy ----------------------- #

def _weighted_ce_kernel(ratio_ref, pred_ref, tgt_ref, loss_out_ref, w_out_ref,
                        loss_acc, w_acc, *, ignore_index):
    n = pl.program_id(1)

    @pl.when(n == 0)
    def _():
        loss_acc[...] = jnp.zeros_like(loss_acc)
        w_acc[...] = jnp.zeros_like(w_acc)

    pred = pred_ref[0].astype(jnp.float32)                          # (C, TILE_N) f32
    tgt = tgt_ref[0]                                                # (1, TILE_N) int32
    ratio = ratio_ref[0]                                            # (C, 1) f32

    c, tn = pred.shape
    cls_iota = jax.lax.broadcasted_iota(jnp.int32, (c, tn), 0)
    onehot = tgt == cls_iota                                        # (C, TILE_N) bool
    valid = tgt != ignore_index                                     # (1, TILE_N) bool

    # Selected target logit and per-pixel area-ratio weight (0 for ignored pixels).
    pred_at_tgt = jnp.sum(jnp.where(onehot, pred, 0.0), axis=0, keepdims=True)     # (1, TILE_N)
    weight_pix = jnp.sum(jnp.where(onehot, ratio, 0.0), axis=0, keepdims=True)     # (1, TILE_N)

    # log-sum-exp over the short class (sublane) axis.
    m = jnp.max(pred, axis=0, keepdims=True)                                       # (1, TILE_N)
    lse = jnp.log(jnp.sum(jnp.exp(pred - m), axis=0, keepdims=True)) + m           # (1, TILE_N)
    loss_pix = jnp.where(valid, lse - pred_at_tgt, 0.0)                            # (1, TILE_N)

    loss_acc[...] += loss_pix * weight_pix
    w_acc[...] += weight_pix

    @pl.when(n == pl.num_programs(1) - 1)
    def _():
        loss_out_ref[0] = jnp.sum(loss_acc[...], keepdims=True)     # (1, 1)
        w_out_ref[0] = jnp.sum(w_acc[...], keepdims=True)           # (1, 1)


class CEWithWeightMapPallas:
    """Pallas port of CEWithWeightMap.forward (use_sigmoid=False, class_weight=None)."""

    def __init__(self, num_class, ignore_index=-1, weight_min=0.5,
                 loss_weight=1.0, loss_name="ce_loss"):
        self.num_class = num_class
        self.ignore_index = ignore_index
        self.weight_min = weight_min
        self.loss_weight = loss_weight
        self.loss_name = loss_name

    def __call__(self, pred_nchw, target):
        B, C, H, W = pred_nchw.shape
        assert C == self.num_class, "num_class must match pred channel dim"
        assert not (0 <= self.ignore_index < C), \
            "ignore_index must lie outside [0, num_class)"
        N = H * W

        # Pure reshapes (no transpose, no dtype cast): classes on sublanes, pixels on lanes.
        pred = pred_nchw.reshape(B, C, N)
        tgt = target.reshape(B, 1, N).astype(jnp.int32)

        tile_n = _choose_tile_n(N, C, pred.dtype.itemsize)
        n_pad = _round_up(N, tile_n)
        if n_pad != N:
            # Padded pixels carry ignore_index -> zero loss, zero weight, not counted.
            pred = jnp.pad(pred, ((0, 0), (0, 0), (0, n_pad - N)))
            tgt = jnp.pad(tgt, ((0, 0), (0, 0), (0, n_pad - N)),
                          constant_values=self.ignore_index)
        nt = n_pad // tile_n

        # ---------------- pass 1: per-image class-area ratio from the target only --------- #
        ratio = pl.pallas_call(
            functools.partial(_class_ratio_kernel,
                              ignore_index=self.ignore_index,
                              weight_min=float(self.weight_min),
                              num_class=C),
            out_shape=jax.ShapeDtypeStruct((B, C), jnp.float32),
            grid_spec=pltpu.PrefetchScalarGridSpec(
                num_scalar_prefetch=0,
                grid=(nt,),
                in_specs=[pl.BlockSpec((B, 1, tile_n), lambda n: (0, 0, n))],
                out_specs=pl.BlockSpec((B, C), lambda n: (0, 0)),
                scratch_shapes=[pltpu.VMEM((B, C), jnp.float32),
                                pltpu.VMEM((B, 1), jnp.float32)]),
            compiler_params=pltpu.CompilerParams(
                dimension_semantics=("arbitrary",)),
        )(tgt)
        ratio3 = ratio.reshape(B, C, 1)   # tiny; lets pass-2 broadcast along sublanes cleanly

        # ---------------- pass 2: tiled, mem-bound weighted cross-entropy ----------------- #
        cost = pl.CostEstimate(
            flops=int(7 * B * n_pad * C),
            transcendentals=int(B * n_pad * (C + 1)),
            bytes_accessed=int(pred.size * pred.dtype.itemsize + tgt.size * 4 + 2 * B * 4),
        )
        loss_part, w_part = pl.pallas_call(
            functools.partial(_weighted_ce_kernel, ignore_index=self.ignore_index),
            out_shape=(jax.ShapeDtypeStruct((B, 1, 1), jnp.float32),
                       jax.ShapeDtypeStruct((B, 1, 1), jnp.float32)),
            grid_spec=pltpu.PrefetchScalarGridSpec(
                num_scalar_prefetch=0,
                grid=(B, nt),
                in_specs=[pl.BlockSpec((1, C, 1), lambda b, n: (b, 0, 0)),
                          pl.BlockSpec((1, C, tile_n), lambda b, n: (b, 0, n)),
                          pl.BlockSpec((1, 1, tile_n), lambda b, n: (b, 0, n))],
                out_specs=[pl.BlockSpec((1, 1, 1), lambda b, n: (b, 0, 0)),
                           pl.BlockSpec((1, 1, 1), lambda b, n: (b, 0, 0))],
                scratch_shapes=[pltpu.VMEM((1, tile_n), jnp.float32),
                                pltpu.VMEM((1, tile_n), jnp.float32)]),
            compiler_params=pltpu.CompilerParams(
                dimension_semantics=("parallel", "arbitrary"),
                vmem_limit_bytes=32 * 1024 * 1024),
            cost_estimate=cost,
        )(ratio3, pred, tgt)

        # Final reduction over the per-image partials (two scalars) in the wrapper.
        total = jnp.sum(loss_part)
        wsum = jnp.sum(w_part)
        loss = jnp.where(wsum == 0.0, total, total / jnp.where(wsum == 0.0, 1.0, wsum))
        return {self.loss_name: self.loss_weight * loss}


def reference_loss(pred_nchw, target, num_class, ignore_index, weight_min, loss_weight):
    """Pure-JAX mirror of the PyTorch CEWithWeightMap.forward for validation."""
    B, C, H, W = pred_nchw.shape
    pred = pred_nchw.astype(jnp.float32)
    tgt = target
    weight = jnp.zeros((B, H, W), jnp.float32)
    tr = tgt.reshape(B, -1)
    target_sum = jnp.sum((tr != ignore_index).astype(jnp.float32), axis=-1)   # (B,)
    for cls_idx in range(num_class):
        sum_area = jnp.sum((tr == cls_idx).astype(jnp.float32), axis=-1)      # (B,)
        if float(jnp.sum(sum_area)) > 0:
            area_ratio = jnp.maximum(1.0 - sum_area / target_sum, weight_min)
            area_ratio = jnp.broadcast_to(area_ratio[:, None, None], (B, H, W))
            weight = jnp.where(tgt == cls_idx, area_ratio, weight)
    logp = jax.nn.log_softmax(pred, axis=1)
    tgt_safe = jnp.clip(tgt, 0, C - 1)
    loss = -jnp.take_along_axis(logp, tgt_safe[:, None, :, :], axis=1)[:, 0]
    loss = jnp.where(tgt == ignore_index, 0.0, loss)
    loss = loss * weight
    wsum = jnp.sum(weight)
    total = jnp.sum(loss)
    out = jnp.where(wsum == 0.0, total, total / jnp.where(wsum == 0.0, 1.0, wsum))
    return loss_weight * out


if __name__ == "__main__":
    B, C, H, W = 2, 4, 16, 16
    ignore_index = -1
    weight_min = 0.5
    loss_weight = 1.0

    key = jax.random.PRNGKey(0)
    k1, k2, k3 = jax.random.split(key, 3)
    pred_nchw = jax.random.normal(k1, (B, C, H, W), dtype=jnp.float32)
    target = jax.random.randint(k2, (B, H, W), 0, C, dtype=jnp.int32)
    # sprinkle some ignore_index pixels
    ign_mask = jax.random.uniform(k3, (B, H, W)) < 0.1
    target = jnp.where(ign_mask, jnp.int32(ignore_index), target)

    model = CEWithWeightMapPallas(num_class=C, ignore_index=ignore_index,
                                  weight_min=weight_min, loss_weight=loss_weight,
                                  loss_name="ce_loss")
    result = model(pred_nchw, target)
    loss = result["ce_loss"]
    jax.block_until_ready(loss)

    ref = reference_loss(pred_nchw, target, C, ignore_index, weight_min, loss_weight)
    assert abs(float(loss) - float(ref)) < 1e-4, (float(loss), float(ref))
    print("KERNEL_OK")
</pallas_src>

<mosaic_0001>
module attributes {stable_mosaic.version = 11 : i64} {
  func.func @_class_ratio_kernel(%arg0: i32, %arg1: memref<2x1x256xi32, #tpu.memory_space<vmem>>, %arg2: memref<2x4xf32, #tpu.memory_space<vmem>>, %arg3: memref<2x4xf32, #tpu.memory_space<vmem>>, %arg4: memref<2x1xf32, #tpu.memory_space<vmem>>) attributes {dimension_semantics = [#tpu.dimension_semantics<arbitrary>], iteration_bounds = array<i64: 1>, scalar_prefetch = 0 : i64, scratch_operands = 2 : i64, tpu.core_type = #tpu.core_type<tc>, window_params = [{transform_indices = @transform_0, window_bounds = array<i64: 2, 1, 256>}, {pipeline_mode = #tpu.pipeline_mode<synchronous>, transform_indices = @transform_1, window_bounds = array<i64: 2, 4>}]} {
    %c0_i32 = arith.constant 0 : i32
    %0 = arith.cmpi eq, %arg0, %c0_i32 : i32
    %1 = arith.extui %0 : i1 to i32
    %c0_i32_0 = arith.constant 0 : i32
    %2 = arith.cmpi ne, %1, %c0_i32_0 : i32
    scf.if %2 {
      %cst_14 = arith.constant 0.000000e+00 : f32
      %24 = vector.broadcast %cst_14 : f32 to vector<2x4xf32>
      %c0_15 = arith.constant 0 : index
      %c0_16 = arith.constant 0 : index
      %25 = vector.load %arg3[%c0_15, %c0_16] : memref<2x4xf32, #tpu.memory_space<vmem>>, vector<2x4xf32>
      tpu.vector_store %arg3[%c0_15, %c0_16], %24 {strides = array<i32>} : memref<2x4xf32, #tpu.memory_space<vmem>>, vector<2x4xf32>,
      %cst_17 = arith.constant 0.000000e+00 : f32
      %26 = vector.broadcast %cst_17 : f32 to vector<2x1xf32>
      %c0_18 = arith.constant 0 : index
      %c0_19 = arith.constant 0 : index
      %27 = vector.load %arg4[%c0_18, %c0_19] : memref<2x1xf32, #tpu.memory_space<vmem>>, vector<2x1xf32>
      tpu.vector_store %arg4[%c0_18, %c0_19], %26 {strides = array<i32>} : memref<2x1xf32, #tpu.memory_space<vmem>>, vector<2x1xf32>,
    } else {
    }
    %c0 = arith.constant 0 : index
    %c0_1 = arith.constant 0 : index
    %c0_2 = arith.constant 0 : index
    %3 = vector.load %arg1[%c0, %c0_1, %c0_2] : memref<2x1x256xi32, #tpu.memory_space<vmem>>, vector<2x1x256xi32>
    %4 = tpu.iota {dimensions = array<i32: 1>} : vector<2x4x256xi32>
    %5 = vector.broadcast %3 : vector<2x1x256xi32> to vector<2x4x256xi32>
    %6 = arith.cmpi eq, %5, %4 : vector<2x4x256xi32>
    %7 = arith.extui %6 : vector<2x4x256xi1> to vector<2x4x256xi32>
    %8 = arith.sitofp %7 : vector<2x4x256xi32> to vector<2x4x256xf32>
    %c0_3 = arith.constant 0 : index
    %c0_4 = arith.constant 0 : index
    %9 = vector.load %arg3[%c0_3, %c0_4] : memref<2x4xf32, #tpu.memory_space<vmem>>, vector<2x4xf32>
    %cst = arith.constant dense<0.000000e+00> : vector<2x4xf32>
    %10 = vector.multi_reduction <add>, %8, %cst [2] : vector<2x4x256xf32> to vector<2x4xf32>
    %11 = arith.addf %9, %10 : vector<2x4xf32>
    %c0_5 = arith.constant 0 : index
    %c0_6 = arith.constant 0 : index
    %12 = vector.load %arg3[%c0_5, %c0_6] : memref<2x4xf32, #tpu.memory_space<vmem>>, vector<2x4xf32>
    tpu.vector_store %arg3[%c0_5, %c0_6], %11 {strides = array<i32>} : memref<2x4xf32, #tpu.memory_space<vmem>>, vector<2x4xf32>,
    %c0_7 = arith.constant 0 : index
    %c0_8 = arith.constant 0 : index
    %13 = vector.load %arg4[%c0_7, %c0_8] : memref<2x1xf32, #tpu.memory_space<vmem>>, vector<2x1xf32>
    %c-1_i32 = arith.constant -1 : i32
    %14 = vector.broadcast %c-1_i32 : i32 to vector<2x1x256xi32>
    %15 = arith.cmpi ne, %3, %14 : vector<2x1x256xi32>
    %16 = arith.extui %15 : vector<2x1x256xi1> to vector<2x1x256xi32>
    %17 = arith.sitofp %16 : vector<2x1x256xi32> to vector<2x1x256xf32>
    %cst_9 = arith.constant dense<0.000000e+00> : vector<2x1xf32>
    %18 = vector.multi_reduction <add>, %17, %cst_9 [2] : vector<2x1x256xf32> to vector<2x1xf32>
    %19 = arith.addf %13, %18 : vector<2x1xf32>
    %c0_10 = arith.constant 0 : index
    %c0_11 = arith.constant 0 : index
    %20 = vector.load %arg4[%c0_10, %c0_11] : memref<2x1xf32, #tpu.memory_space<vmem>>, vector<2x1xf32>
    tpu.vector_store %arg4[%c0_10, %c0_11], %19 {strides = array<i32>} : memref<2x1xf32, #tpu.memory_space<vmem>>, vector<2x1xf32>,
    %c0_i32_12 = arith.constant 0 : i32
    %21 = arith.cmpi eq, %arg0, %c0_i32_12 : i32
    %22 = arith.extui %21 : i1 to i32
    %c0_i32_13 = arith.constant 0 : i32
    %23 = arith.cmpi ne, %22, %c0_i32_13 : i32
    scf.if %23 {
      %c0_14 = arith.constant 0 : index
      %c0_15 = arith.constant 0 : index
      %24 = vector.load %arg4[%c0_14, %c0_15] : memref<2x1xf32, #tpu.memory_space<vmem>>, vector<2x1xf32>
      %cst_16 = arith.constant 1.000000e+00 : f32
      %25 = vector.broadcast %cst_16 : f32 to vector<2x1xf32>
      %26 = arith.maximumf %24, %25 : vector<2x1xf32>
      %c0_17 = arith.constant 0 : index
      %c0_18 = arith.constant 0 : index
      %27 = vector.load %arg3[%c0_17, %c0_18] : memref<2x4xf32, #tpu.memory_space<vmem>>, vector<2x4xf32>
      %28 = vector.broadcast %26 : vector<2x1xf32> to vector<2x4xf32>
      %29 = arith.divf %27, %28 : vector<2x4xf32>
      %cst_19 = arith.constant 1.000000e+00 : f32
      %30 = vector.broadcast %cst_19 : f32 to vector<2x4xf32>
      %31 = arith.subf %30, %29 : vector<2x4xf32>
      %cst_20 = arith.constant 5.000000e-01 : f32
      %32 = vector.broadcast %cst_20 : f32 to vector<2x4xf32>
      %33 = arith.maximumf %31, %32 : vector<2x4xf32>
      %c0_21 = arith.constant 0 : index
      %c0_22 = arith.constant 0 : index
      %34 = vector.load %arg2[%c0_21, %c0_22] : memref<2x4xf32, #tpu.memory_space<vmem>>, vector<2x4xf32>
      tpu.vector_store %arg2[%c0_21, %c0_22], %33 {strides = array<i32>} : memref<2x4xf32, #tpu.memory_space<vmem>>, vector<2x4xf32>,
    } else {
    }
    return
  }
  func.func @transform_0(%arg0: i32) -> (i32, i32, i32) {
    %c0_i32 = arith.constant 0 : i32
    %c0_i32_0 = arith.constant 0 : i32
    %c0_i32_1 = arith.constant 0 : i32
    return %c0_i32, %c0_i32_0, %arg0 : i32, i32, i32
  }
  func.func @transform_1(%arg0: i32) -> (i32, i32) {
    %c0_i32 = arith.constant 0 : i32
    %c0_i32_0 = arith.constant 0 : i32
    %c0_i32_1 = arith.constant 0 : i32
    return %c0_i32, %c0_i32_0 : i32, i32
  }
}

</mosaic_0001>

<llo_original>
// kernel: tpu_custom_call.1
$region0: #{tpu_custom_call.1}
  #allocation0 [shape = 'u32[]', space=smem, size = 0x4, offset = 0x4, fixed_abs, tag = 'smem constant byte address 0x4 - core index']
  #allocation1 [shape = 'u32[144,128]{1,0:T(1,128)}', space=vmem, size = 0x12000, scoped, tag = 'internal scratch']
  #allocation2 [shape = 'f32[2,4]{1,0:T(2,128)}', space=vmem, size = 0x400, scoped, tag = 'scratch operand']
  #allocation3 [shape = 'f32[2,1]{1,0:T(2,128)}', space=vmem, size = 0x400, scoped, tag = 'scratch operand']
  %s0 = inlined_call_operand.hbm [shape: s32[2,1,256], index: 0, kind: input, shape index: {}]
  %s1 = inlined_call_operand.hbm [shape: f32[2,4], index: 1, kind: output, shape index: {}]
  %s2 = sld [smem:[#allocation0]]
  $region26: #{tpu_custom_call.1} parent=0
    _
  %s4 = ssub.s32 1, %s2
  %s5 = scalar_select 0, %s4, %s2
  $region1: #{tpu_custom_call.1} parent=0
    #allocation4 [shape = 'u8[2048]{0}', space=vmem, size = 0x800, scoped, tag = 'input window, operand 0, single buffered']
    #allocation5 [shape = 's32[1]{0}', space=sflag, size = 0x4, scoped, tag = 'scoped memory for tpu_custom_call.1']
    #allocation6 [shape = 's32[1]{0}', space=sflag, size = 0x4, scoped, tag = 'scoped memory for tpu_custom_call.1']
    #allocation7 [shape = 'u8[1024]{0}', space=vmem, size = 0x400, scoped, tag = 'output window, operand 0, single buffered']
    %6 = vsyncpa [#allocation5], 0
    %7 = vsyncpa [#allocation6], 0
    // Predicated region
    $region2: #{tpu_custom_call.1} parent=1 // pred_check
      _
    $region3: #{tpu_custom_call.1} parent=1 // pred_check_branch
      %9 = sbr.rel (0) target = $region5
    $region4: #{tpu_custom_call.1} parent=1 // pred_region
      %s11 = ssub.s32 64, 64
      %12 = vsyncadd [#allocation5], %s11
      %s13 = sshll.u32 [#allocation4], 4
      %s14 = int_to_ptr.vmem [resolvable:$true] %s13
      %19 = dma.hbm_to_vmem [thread:$0]  %s0, 64, %s14, [#allocation5], 32, 32, 2
    $region5: #{tpu_custom_call.1} parent=1 // pred_fallthru
      _
    // Predicated region
    $region6: #{tpu_custom_call.1} parent=1 // pred_check
      _
    $region7: #{tpu_custom_call.1} parent=1 // pred_check_branch
      %21 = sbr.rel (0) target = $region9
    $region8: #{tpu_custom_call.1} parent=1 // pred_region
      %22 = dma.done [#allocation5], 64
    $region9: #{tpu_custom_call.1} parent=1 // pred_fallthru
      _
    %p23 = scmp.eq.s32.totalorder 0, 0
    // Predicated region
    $region10: #{tpu_custom_call.1} parent=1 // pred_check
      %p24 = pneg %p23
    $region11: #{tpu_custom_call.1} parent=1 // pred_check_branch
      %26 = sbr.rel (%p24) target = $region13
    $region12: #{tpu_custom_call.1} parent=1 // pred_region
      %vm27 = vcmask 25600
      %28 = vst.msk [vmem:[#allocation2] sm:$0x3] %vm27, 0.0
      %vm29 = vcmask 1024
      %30 = vst.msk [vmem:[#allocation3] sm:$0x3] %vm29, 0.0
    $region13: #{tpu_custom_call.1} parent=1 // pred_fallthru
      _
    %v31 = vld [vmem:[#allocation4] sm:$0x3]
    %v32 = vld [vmem:[#allocation4 + $0x2] sm:$0x3]
    %v33 = vlaneseq
    %v34 = vshrl.u32 %v33, 7
    %v35 = vlaneseq
    %v36 = vshrl.u32 %v35, 7
    %v37 = vsub.s32 0, %v36
    %v38 = vrot.slane %v31, %v37
    %v39 = vlaneseq
    %v40 = vshrl.u32 %v39, 7
    %v41 = vsub.s32 1, %v40
    %v42 = vrot.slane %v31, %v41
    %v43 = vlaneseq
    %v44 = vshrl.u32 %v43, 7
    %v45 = vsub.s32 0, %v44
    %v46 = vrot.slane %v32, %v45
    %v47 = vlaneseq
    %v48 = vshrl.u32 %v47, 7
    %v49 = vsub.s32 1, %v48
    %v50 = vrot.slane %v32, %v49
    %vm51 = vcmp.eq.s32.totalorder %v38, %v34
    %vm52 = vcmp.eq.s32.totalorder %v42, %v34
    %vm53 = vcmp.eq.s32.totalorder %v46, %v34
    %vm54 = vcmp.eq.s32.totalorder %v50, %v34
    %v55 = vsel %vm51, 1, 0
    %v56 = vsel %vm52, 1, 0
    %v57 = vsel %vm53, 1, 0
    %v58 = vsel %vm54, 1, 0
    %v59 = vcvt.s32.f32 %v55
    %v60 = vcvt.s32.f32 %v56
    %v61 = vcvt.s32.f32 %v57
    %v62 = vcvt.s32.f32 %v58
    %v63 = vld [vmem:[#allocation2] sm:$0x3]
    %vm64 = vcmask 1043456
    %v65 = vsel %vm64, %v59, 0.0
    %v66 = vsel %vm64, %v60, 0.0
    %v67 = vadd.f32 %v65, %v66
    %68 = vadd.xlane.f32.xlu0 %v67
    %v69 = vpop.xlane.xlu0 %68
    %v70 = vsel %vm64, %v61, 0.0
    %v71 = vsel %vm64, %v62, 0.0
    %v72 = vadd.f32 %v70, %v71
    %73 = vadd.xlane.f32.xlu0 %v72
    %v74 = vpop.xlane.xlu0 %73
    %v77 = vlaneseq
    %v78 = vand.u32 %v77, 127
    %v79 = vlaneseq
    %v80 = vshrl.u32 %v79, 7
    %v81 = vsub.s32 %v78, %v80
    %v82 = vrot.slane %v69, %v81
    %v83 = vlaneseq
    %v84 = vshrl.u32 %v83, 7
    %v85 = vsub.s32 %v78, %v84
    %v86 = vrot.slane %v74, %v85
    %vm87 = vcmask 1041409
    %v88 = vsel %vm87, %v86, %v82
    %v90 = vadd.f32 %v63, %v88
    %vm91 = vcmask 25600
    %92 = vst.msk [vmem:[#allocation2] sm:$0x3] %vm91, %v90
    %v93 = vld [vmem:[#allocation3] sm:$0x3]
    %vm94 = vcmp.ne.s32.totalorder %v31, 4294967295
    %vm95 = vcmp.ne.s32.totalorder %v32, 4294967295
    %v96 = vsel %vm94, 1, 0
    %v97 = vsel %vm95, 1, 0
    %v98 = vcvt.s32.f32 %v96
    %v99 = vcvt.s32.f32 %v97
    %v102 = vlaneseq
    %v103 = vshrl.u32 %v102, 7
    %v104 = vsub.s32 0, %v103
    %v105 = vrot.slane %v98, %v104
    %v106 = vlaneseq
    %v107 = vshrl.u32 %v106, 7
    %v108 = vsub.s32 1, %v107
    %v109 = vrot.slane %v98, %v108
    %v110 = vlaneseq
    %v111 = vshrl.u32 %v110, 7
    %v112 = vsub.s32 0, %v111
    %v113 = vrot.slane %v99, %v112
    %v114 = vlaneseq
    %v115 = vshrl.u32 %v114, 7
    %v116 = vsub.s32 1, %v115
    %v117 = vrot.slane %v99, %v116
    %vm122 = vcmask 1040384
    %v123 = vsel %vm122, %v105, 0.0
    %v124 = vsel %vm122, %v109, 0.0
    %v125 = vadd.f32 %v123, %v124
    %126 = vadd.xlane.f32.xlu0 %v125
    %v127 = vpop.xlane.xlu0 %126
    %v128 = vsel %vm122, %v113, 0.0
    %v129 = vsel %vm122, %v117, 0.0
    %v130 = vadd.f32 %v128, %v129
    %131 = vadd.xlane.f32.xlu0 %v130
    %v132 = vpop.xlane.xlu0 %131
    %v135 = vrot.slane %v132, 7
    %v136 = vsel %vm87, %v135, %v127
    %v138 = vadd.f32 %v93, %v136
    %vm139 = vcmask 1024
    %140 = vst.msk [vmem:[#allocation3] sm:$0x3] %vm139, %v138
    // Predicated region
    $region14: #{tpu_custom_call.1} parent=1 // pred_check
      %p141 = pneg %p23
    $region15: #{tpu_custom_call.1} parent=1 // pred_check_branch
      %143 = sbr.rel (%p141) target = $region17
    $region16: #{tpu_custom_call.1} parent=1 // pred_region
      %v144 = vld [vmem:[#allocation3] sm:$0x3]
      %v145 = vmax.f32 %v144, 1.0
      %v146 = vld [vmem:[#allocation2] sm:$0x3]
      %148 = vset.pattern.permute.xlu0 0
      %149 = vperm.xlu0 %148, %v145
      %v150 = vpop.permute.xlu0 %149
      %v152 = vrcp.pop %v150
      %v153 = vmul.f32 %v146, %v152
      %v154 = vsub.f32 1.0, %v153
      %v155 = vmax.f32 %v154, 0.5
      %156 = vst.msk [vmem:[#allocation7] sm:$0x3] %vm91, %v155
    $region17: #{tpu_custom_call.1} parent=1 // pred_fallthru
      _
    // Predicated region
    $region18: #{tpu_custom_call.1} parent=1 // pred_check
      _
    $region19: #{tpu_custom_call.1} parent=1 // pred_check_branch
      %158 = sbr.rel (0) target = $region21
    $region20: #{tpu_custom_call.1} parent=1 // pred_region
      %s160 = ssub.s32 32, 32
      %161 = vsyncadd [#allocation6], %s160
      %s163 = sshll.u32 [#allocation7], 4
      %s164 = int_to_ptr.vmem [resolvable:$true] %s163
      %166 = dma.vmem_to_hbm [thread:$0]  %s164, 32, %s1, [#allocation6]
    $region21: #{tpu_custom_call.1} parent=1 // pred_fallthru
      _
    // Predicated region
    $region22: #{tpu_custom_call.1} parent=1 // pred_check
      _
    $region23: #{tpu_custom_call.1} parent=1 // pred_check_branch
      %168 = sbr.rel (0) target = $region25
    $region24: #{tpu_custom_call.1} parent=1 // pred_region
      %169 = dma.done [#allocation6], 32
    $region25: #{tpu_custom_call.1} parent=1 // pred_fallthru
      _
    %170 = vsyncpa [#allocation5], 1
    %171 = vsyncpa [#allocation6], 1

</llo_original>
